<compile_context>
chip_gen: v7x
topology: tpu7x:2x2x1
jax: 0.10.0
libtpu: 0.0.40
codegen_flags: <defaults>
</compile_context>

<pallas_src>
import numpy as np
import jax
import jax.numpy as jnp
from jax import lax
from jax.experimental import pallas as pl
from jax.experimental.pallas import tpu as pltpu


def _round_up(x, m):
    return (x + m - 1) // m * m


def _embed_add_kernel(ids_ref, emb_ref, pe_ref, out_ref):
    """One (T_s, D_pad) output tile: MXU one-hot gather + dense PE add.

    ids_ref : VMEM (T_s, 1)     int32 token ids for this tile
    emb_ref : VMEM (V, D_pad)   resident embedding table
    pe_ref  : VMEM (T_s, D_pad) streamed positional-encoding tile (f32)
    out_ref : VMEM (T_s, D_pad) output tile
    """
    t = ids_ref.shape[0]
    v = emb_ref.shape[0]
    idx = ids_ref[...]                                          # (T_s, 1)
    vocab_iota = lax.broadcasted_iota(jnp.int32, (t, v), 1)     # (T_s, V)
    one_hot = (idx == vocab_iota).astype(emb_ref.dtype)         # (T_s, V)
    rows = jnp.dot(one_hot, emb_ref[...],
                   preferred_element_type=jnp.float32)          # (T_s, D_pad) f32
    out_ref[...] = (rows + pe_ref[...].astype(jnp.float32)).astype(out_ref.dtype)


def token_and_position_embedding(ids, emb_table, pe, *, tile_seq=256):
    """ids: (B, S) int token ids; emb_table: (V, D); pe: (max_len, D)."""
    B, S = ids.shape
    V, D = emb_table.shape
    if S > pe.shape[0]:
        raise ValueError(f"sequence length {S} exceeds max_len {pe.shape[0]}")

    # PyTorch adds the (always-f32) PE buffer to the embedding output; result
    # dtype follows the usual promotion rule (bf16 table + f32 pe -> f32).
    out_dtype = jnp.promote_types(emb_table.dtype, jnp.float32)

    # Lane-dense last dim (multiple of 128) -> unmasked stores everywhere.
    D_pad = _round_up(D, 128)

    # Sequence tile: multiple of 8 sublanes; if the sequence is split across
    # several tiles, the tile must also be a multiple of 128 so every block
    # (including the (T_s,)-wide ids block) is a legal tiling of its array.
    if S <= tile_seq:
        T_s = _round_up(S, 8)
        S_pad = T_s
    else:
        T_s = _round_up(tile_seq, 128)
        S_pad = _round_up(S, T_s)
    num_seq_tiles = S_pad // T_s

    # Clamp ids: out-of-range rows would otherwise just yield zeros from the
    # one-hot (PyTorch would raise) -- documented semantic divergence.
    ids_p = jnp.clip(ids.astype(jnp.int32), 0, V - 1)
    ids_p = jnp.pad(ids_p, ((0, 0), (0, S_pad - S)))
    ids_p = ids_p.reshape(B, S_pad, 1)        # trailing dim 1: ids land on sublanes

    emb_p = emb_table
    if D_pad != D:
        emb_p = jnp.pad(emb_p, ((0, 0), (0, D_pad - D)))

    pe_s = pe[:S, :].astype(jnp.float32)      # like `self.pe[:x.size(1), :]`
    pe_p = jnp.pad(pe_s, ((0, S_pad - S), (0, D_pad - D)))

    # VMEM budget: (default double-buffered) resident table + streamed PE/out
    # tiles + the in-kernel (T_s, V) one-hot intermediate; cap at physical VMEM.
    emb_b = jnp.dtype(emb_p.dtype).itemsize
    out_b = jnp.dtype(out_dtype).itemsize
    needed = (2 * V * D_pad * emb_b
              + 2 * T_s * D_pad * 4
              + 2 * T_s * D_pad * out_b
              + 2 * T_s * V * emb_b
              + (4 << 20))
    try:
        vmem_cap = pltpu.get_tpu_info().vmem_capacity_bytes
    except Exception:
        vmem_cap = 64 * 1024 * 1024
    vmem_limit = int(min(vmem_cap, max(16 * 1024 * 1024, needed)))
    # TODO(synk): for vocab tables too large for VMEM (esp. v7x's 64 MiB), add an
    # HBM-resident path (memory_space=pl.ANY + V-chunked one-hot matmul fed by
    # manually pipelined make_async_copy), and use CORE_PARALLEL / core_map to
    # shard the (batch, seq-tile) grid across v7x's two TensorCores.

    out_p = pl.pallas_call(
        _embed_add_kernel,
        out_shape=jax.ShapeDtypeStruct((B, S_pad, D_pad), out_dtype),
        grid=(B, num_seq_tiles),
        in_specs=[
            pl.BlockSpec((None, T_s, 1), lambda b, s: (b, s, 0)),     # ids tile
            pl.BlockSpec((V, D_pad), lambda b, s: (0, 0)),            # resident table
            pl.BlockSpec((T_s, D_pad), lambda b, s: (s, 0)),          # streamed PE
        ],
        out_specs=pl.BlockSpec((None, T_s, D_pad), lambda b, s: (b, s, 0)),
        compiler_params=pltpu.CompilerParams(
            dimension_semantics=("parallel", "parallel"),
            vmem_limit_bytes=vmem_limit,
        ),
    )(ids_p, emb_p, pe_p)

    return out_p[:, :S, :D]


def make_sine_position_encoding(embed_dim, max_len=5000):
    """Deterministic reproduction of SinePositionEncoding.__init__ buffer `pe`."""
    position = np.arange(max_len, dtype=np.float32)[:, None]              # (max_len, 1)
    div_term = np.exp(
        np.arange(0, embed_dim, 2, dtype=np.float32)
        * (-np.log(10000.0) / embed_dim)
    )                                                                      # (ceil(D/2),)
    pe = np.zeros((max_len, embed_dim), dtype=np.float32)
    sin = np.sin(position * div_term)
    cos = np.cos(position * div_term)
    pe[:, 0::2] = sin[:, : pe[:, 0::2].shape[1]]
    pe[:, 1::2] = cos[:, : pe[:, 1::2].shape[1]]
    return jnp.asarray(pe)


if __name__ == "__main__":
    # Small, deterministic setup.
    vocab_size = 64
    embed_dim = 32
    batch = 2
    seq = 8
    max_len = 5000

    key = jax.random.PRNGKey(0)
    k_emb, k_ids = jax.random.split(key)

    # nn.Embedding default init: N(0, 1).
    emb_table = jax.random.normal(k_emb, (vocab_size, embed_dim), dtype=jnp.float32)
    pe = make_sine_position_encoding(embed_dim, max_len)

    ids = jax.random.randint(k_ids, (batch, seq), 0, vocab_size, dtype=jnp.int32)

    out = token_and_position_embedding(ids, emb_table, pe)
    out = jax.block_until_ready(out)

    # Pure-JAX reference check.
    ref = emb_table[ids] + pe[:seq, :][None, :, :]
    assert out.shape == (batch, seq, embed_dim)
    np.testing.assert_allclose(np.asarray(out), np.asarray(ref), rtol=1e-6, atol=1e-6)

    print("KERNEL_OK")
</pallas_src>

<mosaic_0001>
module attributes {stable_mosaic.version = 11 : i64} {
  func.func @_embed_add_kernel(%arg0: i32, %arg1: i32, %arg2: memref<1x8x1xi32, #tpu.memory_space<vmem>>, %arg3: memref<64x128xf32, #tpu.memory_space<vmem>>, %arg4: memref<8x128xf32, #tpu.memory_space<vmem>>, %arg5: memref<1x8x128xf32, #tpu.memory_space<vmem>>) attributes {dimension_semantics = [#tpu.dimension_semantics<parallel>, #tpu.dimension_semantics<parallel>], iteration_bounds = array<i64: 2, 1>, scalar_prefetch = 0 : i64, scratch_operands = 0 : i64, tpu.core_type = #tpu.core_type<tc>, window_params = [{transform_indices = @transform_0, window_bounds = array<i64: 1, 8, 1>}, {pipeline_mode = #tpu.pipeline_mode<synchronous>, transform_indices = @transform_1, window_bounds = array<i64: 64, 128>}, {transform_indices = @transform_2, window_bounds = array<i64: 8, 128>}, {transform_indices = @transform_3, window_bounds = array<i64: 1, 8, 128>}]} {
    %c0 = arith.constant 0 : index
    %c0_0 = arith.constant 0 : index
    %c0_1 = arith.constant 0 : index
    %0 = vector.load %arg2[%c0, %c0_0, %c0_1] : memref<1x8x1xi32, #tpu.memory_space<vmem>>, vector<1x8x1xi32>
    %1 = vector.shape_cast %0 : vector<1x8x1xi32> to vector<8x1xi32>
    %2 = tpu.iota {dimensions = array<i32: 1>} : vector<8x64xi32>
    %3 = vector.broadcast %1 : vector<8x1xi32> to vector<8x64xi32>
    %4 = arith.cmpi eq, %3, %2 : vector<8x64xi32>
    %5 = arith.extui %4 : vector<8x64xi1> to vector<8x64xi32>
    %6 = arith.sitofp %5 : vector<8x64xi32> to vector<8x64xf32>
    %c0_2 = arith.constant 0 : index
    %c0_3 = arith.constant 0 : index
    %7 = vector.load %arg3[%c0_2, %c0_3] : memref<64x128xf32, #tpu.memory_space<vmem>>, vector<64x128xf32>
    %cst = arith.constant dense<0.000000e+00> : vector<8x128xf32>
    %8 = tpu.matmul %6, %7, %cst {dimension_numbers = #tpu.dot_dimension_numbers<[1], [0], [0], [1], [0, 0, 1, 1], [], []>} : vector<8x64xf32>, vector<64x128xf32>, vector<8x128xf32> -> vector<8x128xf32>
    %c0_4 = arith.constant 0 : index
    %c0_5 = arith.constant 0 : index
    %9 = vector.load %arg4[%c0_4, %c0_5] : memref<8x128xf32, #tpu.memory_space<vmem>>, vector<8x128xf32>
    %10 = arith.addf %8, %9 : vector<8x128xf32>
    %c0_6 = arith.constant 0 : index
    %c0_7 = arith.constant 0 : index
    %c0_8 = arith.constant 0 : index
    %11 = vector.load %arg5[%c0_6, %c0_7, %c0_8] : memref<1x8x128xf32, #tpu.memory_space<vmem>>, vector<1x8x128xf32>
    %12 = vector.shape_cast %11 : vector<1x8x128xf32> to vector<8x128xf32>
    %13 = vector.shape_cast %10 : vector<8x128xf32> to vector<1x8x128xf32>
    tpu.vector_store %arg5[%c0_6, %c0_7, %c0_8], %13 {strides = array<i32>} : memref<1x8x128xf32, #tpu.memory_space<vmem>>, vector<1x8x128xf32>,
    return
  }
  func.func @transform_0(%arg0: i32, %arg1: i32) -> (i32, i32, i32) {
    %c0_i32 = arith.constant 0 : i32
    %c0_i32_0 = arith.constant 0 : i32
    return %arg0, %arg1, %c0_i32 : i32, i32, i32
  }
  func.func @transform_1(%arg0: i32, %arg1: i32) -> (i32, i32) {
    %c0_i32 = arith.constant 0 : i32
    %c0_i32_0 = arith.constant 0 : i32
    %c0_i32_1 = arith.constant 0 : i32
    return %c0_i32, %c0_i32_0 : i32, i32
  }
  func.func @transform_2(%arg0: i32, %arg1: i32) -> (i32, i32) {
    %c0_i32 = arith.constant 0 : i32
    %c0_i32_0 = arith.constant 0 : i32
    return %arg1, %c0_i32 : i32, i32
  }
  func.func @transform_3(%arg0: i32, %arg1: i32) -> (i32, i32, i32) {
    %c0_i32 = arith.constant 0 : i32
    %c0_i32_0 = arith.constant 0 : i32
    return %arg0, %arg1, %c0_i32 : i32, i32, i32
  }
}

</mosaic_0001>

<llo_original>
// kernel: tpu_custom_call.1
$region0: #{tpu_custom_call.1}
  #allocation0 [shape = 'u32[]', space=smem, size = 0x4, offset = 0x4, fixed_abs, tag = 'smem constant byte address 0x4 - core index']
  #allocation1 [shape = 'u32[144,128]{1,0:T(1,128)}', space=vmem, size = 0x12000, scoped, tag = 'internal scratch']
  %s0 = inlined_call_operand.vmem [shape: s32[2,8,1], index: 0, kind: input, shape index: {}]
  %s1 = inlined_call_operand.hbm [shape: f32[64,128], index: 1, kind: input, shape index: {}]
  %s2 = inlined_call_operand.vmem [shape: f32[8,128], index: 2, kind: input, shape index: {}]
  %s3 = inlined_call_operand.hbm [shape: f32[2,8,128], index: 3, kind: output, shape index: {}]
  %s4 = sld [smem:[#allocation0]]
  $region49: #{tpu_custom_call.1} parent=0
    _
  %s6 = ssub.s32 1, %s4
  %s7 = scalar_select 0, %s6, %s4
  $region1: #{tpu_custom_call.1} parent=0
    #allocation2 [shape = 'u8[32768]{0}', space=vmem, size = 0x8000, scoped, tag = 'input window, operand 1, single buffered']
    #allocation3 [shape = 's32[2]{0}', space=sflag, size = 0x8, scoped, tag = 'scoped memory for tpu_custom_call.1']
    #allocation4 [shape = 's32[2]{0}', space=sflag, size = 0x8, scoped, tag = 'scoped memory for tpu_custom_call.1']
    #allocation5 [shape = 'u8[8192]{0}', space=vmem, size = 0x2000, scoped, tag = 'output window, operand 0']
    %8 = vsyncpa [#allocation3], 0
    %9 = vsyncpa [#allocation4], 0
    %s10 = scalar_lea.sflag [#allocation4], 1
    %11 = vsyncpa %s10, 0
    loop: start=0, step=1, limit=4
    $region2: #{tpu_custom_call.1} parent=1 // loop_pre_header
      _
    $region3: #{tpu_custom_call.1} parent=1 // loop_header
      %s13 = sphi 0, %s17
      %p14 = scmp.ge.s32.totalorder %s13, 4
      %s20 = sphi 0, %s32
      %s21 = sphi 0, %s28
      %s22 = sphi 0, %s20
      %s23 = sphi 0, %s21
      %s24 = sphi 0, %s22
      %s25 = sphi 0, %s23
      %s37 = sphi 0, %s39
      %s40 = sphi 0, %s37
      %s41 = sphi 0, %s40
      %s57 = sphi 0, %s41
      %s61 = sphi 0, %s61
      %s63 = sphi 0, %s61
      %s64 = sphi 0, %s63
      %s78 = sphi 0, %s64
      %s84 = sphi 0, %s86
      %s87 = sphi 0, %s84
      %s88 = sphi 0, %s87
      %s104 = sphi 0, %s88
      %s112 = sphi 0, %s114
      %s115 = sphi 0, %s112
      %s116 = sphi 0, %s115
      %s132 = sphi 0, %s116
    $region4: #{tpu_custom_call.1} parent=1 // loop_header_branch
      %16 = sbr.rel (%p14) target = $region8
    $region5: #{tpu_custom_call.1} parent=1 // loop_body
      %s18 = ssub.s32 %s13, 1
      %s19 = ssub.s32 %s13, 2
      %s26 = sadd.s32 1, %s21
      %p27 = scmp.ge.s32.totalorder %s26, 1
      %s28 = scalar_select %p27, 0, %s26
      %s29 = sadd.s32 1, %s20
      %s30 = scalar_select %p27, %s29, %s20
      %p31 = scmp.ge.s32.totalorder %s30, 2
      %s32 = scalar_select %p31, 0, %s30
      %s33 = ssub.s32 %s20, %s32
      %s34 = ssub.s32 %s21, %s28
      %s35 = sor.u32 %s33, %s34
      %p36 = scmp.eq.s32.totalorder %s35, 0
      %s38 = sadd.s32 %s37, 1
      %s39 = scalar_select %p36, %s37, %s38
      %p42 = pneg %p36
      %p43 = scmp.eq.s32.totalorder %s13, 1
      %p44 = por %p42, %p43
      %p45 = scmp.ne.s32.totalorder %s37, %s40
      %p46 = scmp.eq.s32.totalorder %s13, 0
      %p47 = por %p45, %p46
      %p48 = scmp.ne.s32.totalorder %s37, %s40
      %p49 = scmp.eq.s32.totalorder %s18, 1
      %p50 = por %p48, %p49
      %p51 = scmp.ne.s32.totalorder %s40, %s41
      %p52 = scmp.eq.s32.totalorder %s18, 0
      %p53 = por %p51, %p52
      %p54 = scmp.ne.s32.totalorder %s40, %s41
      %p55 = scmp.eq.s32.totalorder %s19, 1
      %p56 = por %p54, %p55
      %p58 = scmp.ne.s32.totalorder %s41, %s57
      %p59 = scmp.eq.s32.totalorder %s19, 0
      %p60 = por %p58, %p59
      %s62 = sadd.s32 %s61, 1
      %p65 = scmp.eq.s32.totalorder %s13, 1
      %p66 = scmp.ne.s32.totalorder %s61, %s63
      %p67 = scmp.eq.s32.totalorder %s13, 0
      %p68 = por %p66, %p67
      %p69 = scmp.ne.s32.totalorder %s61, %s63
      %p70 = scmp.eq.s32.totalorder %s18, 1
      %p71 = por %p69, %p70
      %p72 = scmp.ne.s32.totalorder %s63, %s64
      %p73 = scmp.eq.s32.totalorder %s18, 0
      %p74 = por %p72, %p73
      %p75 = scmp.ne.s32.totalorder %s63, %s64
      %p76 = scmp.eq.s32.totalorder %s19, 1
      %p77 = por %p75, %p76
      %p79 = scmp.ne.s32.totalorder %s64, %s78
      %p80 = scmp.eq.s32.totalorder %s19, 0
      %p81 = por %p79, %p80
      %s82 = ssub.s32 %s21, %s28
      %p83 = scmp.eq.s32.totalorder %s82, 0
      %s85 = sadd.s32 %s84, 1
      %s86 = scalar_select %p83, %s84, %s85
      %p89 = pneg %p83
      %p90 = scmp.eq.s32.totalorder %s13, 1
      %p91 = por %p89, %p90
      %p92 = scmp.ne.s32.totalorder %s84, %s87
      %p93 = scmp.eq.s32.totalorder %s13, 0
      %p94 = por %p92, %p93
      %p95 = scmp.ne.s32.totalorder %s84, %s87
      %p96 = scmp.eq.s32.totalorder %s18, 1
      %p97 = por %p95, %p96
      %p98 = scmp.ne.s32.totalorder %s87, %s88
      %p99 = scmp.eq.s32.totalorder %s18, 0
      %p100 = por %p98, %p99
      %p101 = scmp.ne.s32.totalorder %s87, %s88
      %p102 = scmp.eq.s32.totalorder %s19, 1
      %p103 = por %p101, %p102
      %p105 = scmp.ne.s32.totalorder %s88, %s104
      %p106 = scmp.eq.s32.totalorder %s19, 0
      %p107 = por %p105, %p106
      %s108 = ssub.s32 %s20, %s32
      %s109 = ssub.s32 %s21, %s28
      %s110 = sor.u32 %s108, %s109
      %p111 = scmp.eq.s32.totalorder %s110, 0
      %s113 = sadd.s32 %s112, 1
      %s114 = scalar_select %p111, %s112, %s113
      %p117 = pneg %p111
      %p118 = scmp.eq.s32.totalorder %s13, 1
      %p119 = por %p117, %p118
      %p120 = scmp.ne.s32.totalorder %s112, %s115
      %p121 = scmp.eq.s32.totalorder %s13, 0
      %p122 = por %p120, %p121
      %p123 = scmp.ne.s32.totalorder %s112, %s115
      %p124 = scmp.eq.s32.totalorder %s18, 1
      %p125 = por %p123, %p124
      %p126 = scmp.ne.s32.totalorder %s115, %s116
      %p127 = scmp.eq.s32.totalorder %s18, 0
      %p128 = por %p126, %p127
      %p129 = scmp.ne.s32.totalorder %s115, %s116
      %p130 = scmp.eq.s32.totalorder %s19, 1
      %p131 = por %p129, %p130
      %p133 = scmp.ne.s32.totalorder %s116, %s132
      %p134 = scmp.eq.s32.totalorder %s19, 0
      %p135 = por %p133, %p134
      %p136 = scmp.le.s32.totalorder 1, %s13
      %p137 = scmp.lt.s32.totalorder %s13, 3
      %p138 = pnand %p136, %p137
      %p139 = pneg %p138
      // Predicated region
      $region9: #{tpu_custom_call.1} parent=5 // pred_check
        _
      $region10: #{tpu_custom_call.1} parent=5 // pred_check_branch
        %141 = sbr.rel (%p138) target = $region12
      $region11: #{tpu_custom_call.1} parent=5 // pred_region
        %s142 = ssub.s32 %s13, 1
        // Predicated region
        $region13: #{tpu_custom_call.1} parent=11 // pred_check
          %p143 = pneg %p74
        $region14: #{tpu_custom_call.1} parent=11 // pred_check_branch
          %145 = sbr.rel (%p143) target = $region16
        $region15: #{tpu_custom_call.1} parent=11 // pred_region
          %s147 = ssub.s32 1024, 1024
          %148 = vsyncadd [#allocation3], %s147
          %s149 = sshll.u32 [#allocation2], 4
          %s150 = int_to_ptr.vmem [resolvable:$true] %s149
          %155 = dma.hbm_to_vmem [thread:$0]  %s1, 1024, %s150, [#allocation3], 128, 128, 8
        $region16: #{tpu_custom_call.1} parent=11 // pred_fallthru
          _
        // Predicated region
        $region17: #{tpu_custom_call.1} parent=11 // pred_check
          %p156 = pneg %p100
        $region18: #{tpu_custom_call.1} parent=11 // pred_check_branch
          %158 = sbr.rel (%p156) target = $region20
        $region19: #{tpu_custom_call.1} parent=11 // pred_region
          %p159 = scmp.lt.s32.totalorder %s23, 0
          %s160 = scalar_select %p159, %s23, 0
          %s161 = smul.addr %s160, 8
          %s162 = scalar_lea.vmem %s2, %s161
        $region20: #{tpu_custom_call.1} parent=11 // pred_fallthru
          _
      $region12: #{tpu_custom_call.1} parent=5 // pred_fallthru
        _
      %p163 = scmp.lt.s32.totalorder %s13, 2
      // Predicated region
      $region21: #{tpu_custom_call.1} parent=5 // pred_check
        %p164 = pneg %p163
      $region22: #{tpu_custom_call.1} parent=5 // pred_check_branch
        %166 = sbr.rel (%p164) target = $region24
      $region23: #{tpu_custom_call.1} parent=5 // pred_region
        // Predicated region
        $region25: #{tpu_custom_call.1} parent=23 // pred_check
          %p167 = pneg %p47
        $region26: #{tpu_custom_call.1} parent=23 // pred_check_branch
          %169 = sbr.rel (%p167) target = $region28
        $region27: #{tpu_custom_call.1} parent=23 // pred_region
          %p170 = scmp.lt.s32.totalorder %s20, 1
          %s171 = scalar_select %p170, %s20, 1
          %p172 = scmp.lt.s32.totalorder %s21, 0
          %s173 = scalar_select %p172, %s21, 0
          %s174 = sadd.s32 %s173, %s171
          %s175 = smul.addr %s174, 8
          %s176 = scalar_lea.vmem %s0, %s175
        $region28: #{tpu_custom_call.1} parent=23 // pred_fallthru
          _
      $region24: #{tpu_custom_call.1} parent=5 // pred_fallthru
        _
      %p177 = scmp.le.s32.totalorder 1, %s13
      %p178 = scmp.lt.s32.totalorder %s13, 3
      %p179 = pnand %p177, %p178
      %p180 = pneg %p179
      // Predicated region
      $region29: #{tpu_custom_call.1} parent=5 // pred_check
        _
      $region30: #{tpu_custom_call.1} parent=5 // pred_check_branch
        %182 = sbr.rel (%p179) target = $region32
      $region31: #{tpu_custom_call.1} parent=5 // pred_region
        %s183 = ssub.s32 %s13, 1
        // Predicated region
        $region33: #{tpu_custom_call.1} parent=31 // pred_check
          %p184 = pneg %p74
        $region34: #{tpu_custom_call.1} parent=31 // pred_check_branch
          %186 = sbr.rel (%p184) target = $region36
        $region35: #{tpu_custom_call.1} parent=31 // pred_region
          %187 = dma.done [#allocation3], 1024
        $region36: #{tpu_custom_call.1} parent=31 // pred_fallthru
          _
        %p188 = scmp.lt.s32.totalorder %s22, 1
        %s189 = scalar_select %p188, %s22, 1
        %p190 = scmp.lt.s32.totalorder %s23, 0
        %s191 = scalar_select %p190, %s23, 0
        %s192 = sadd.s32 %s191, %s189
        %s193 = smul.addr %s192, 8
        %s194 = scalar_lea.vmem %s0, %s193
        %p195 = pneg %p53
        %p196 = pneg %p50
        %p197 = pneg %p74
        %p198 = pneg %p71
        %p199 = scmp.lt.s32.totalorder %s23, 0
        %s200 = scalar_select %p199, %s23, 0
        %s201 = smul.addr %s200, 8
        %s202 = scalar_lea.vmem %s2, %s201
        %p203 = pneg %p100
        %p204 = pneg %p97
        %p205 = pneg %p128
        %p206 = pneg %p125
        %s207 = sand.u32 %s115, 1
        %s208 = scalar_lea.sflag [#allocation4], %s207
        %s209 = sand.u32 %s115, 1
        %s210 = smul.addr %s209, 8
        %s211 = scalar_lea.vmem [#allocation5], %s210
        %p212 = scmp.lt.s32.totalorder %s22, 1
        %s213 = scalar_select %p212, %s22, 1
        %p214 = scmp.lt.s32.totalorder %s23, 0
        %s215 = scalar_select %p214, %s23, 0
        %s216 = sadd.s32 %s215, %s213
        %s217 = smul.addr %s216, 8
        %s218 = scalar_lea.vmem %s0, %s217
        %p219 = scmp.lt.s32.totalorder %s23, 0
        %s220 = scalar_select %p219, %s23, 0
        %s221 = smul.addr %s220, 8
        %s222 = scalar_lea.vmem %s2, %s221
        %v223 = vld [vmem:[%s218] sm:$0xff]
        %v224 = vlaneseq
        %v225 = vand.u32 %v224, 127
        %226 = vset.pattern.permute.xlu0 0
        %227 = vperm.xlu0 %226, %v223
        %v228 = vpop.permute.xlu0 %227
        %vm229 = vcmp.eq.s32.totalorder %v228, %v225
        %v230 = vsel %vm229, 1, 0
        %v231 = vcvt.s32.f32 %v230
        %v232 = vld [vmem:[#allocation2] sm:$0xff]
        %v233 = vld [vmem:[#allocation2 + $0x8] sm:$0xff]
        %v234 = vld [vmem:[#allocation2 + $0x10] sm:$0xff]
        %v235 = vld [vmem:[#allocation2 + $0x18] sm:$0xff]
        %v236 = vld [vmem:[#allocation2 + $0x20] sm:$0xff]
        %v237 = vld [vmem:[#allocation2 + $0x28] sm:$0xff]
        %v238 = vld [vmem:[#allocation2 + $0x30] sm:$0xff]
        %v239 = vld [vmem:[#allocation2 + $0x38] sm:$0xff]
        %v240 = vld [vmem:[%s222] sm:$0xff]
        %vm241 = vcmask 523264
        %v243 = vsel %vm241, %v231, 0
        %245 = vmatprep.subr.mxu0 0.0
        %246 = vmatpush1.msra.mxu0 %v232
        %247 = vmatprep.subr.mxu0 0.0
        %248 = vmatpush1.msra.mxu0 %v233
        %249 = vmatprep.subr.mxu0 0.0
        %250 = vmatpush1.msra.mxu0 %v234
        %251 = vmatprep.subr.mxu0 0.0
        %252 = vmatpush1.msra.mxu0 %v235
        %253 = vmatprep.subr.mxu0 0.0
        %254 = vmatpush1.msra.mxu0 %v236
        %255 = vmatprep.subr.mxu0 0.0
        %256 = vmatpush1.msra.mxu0 %v237
        %257 = vmatprep.subr.mxu0 0.0
        %258 = vmatpush1.msra.mxu0 %v238
        %259 = vmatprep.subr.mxu0 0.0
        %260 = vmatpush1.msra.mxu0 %v239
        %261 = vmatprep.subr.mxu0 0.0
        %262 = vmatpush1.msra.mxu0 0.0
        %263 = vmatprep.subr.mxu0 0.0
        %264 = vmatpush1.msra.mxu0 0.0
        %265 = vmatprep.subr.mxu0 0.0
        %266 = vmatpush1.msra.mxu0 0.0
        %267 = vmatprep.subr.mxu0 0.0
        %268 = vmatpush1.msra.mxu0 0.0
        %269 = vmatprep.subr.mxu0 0.0
        %270 = vmatpush1.msra.mxu0 0.0
        %271 = vmatprep.subr.mxu0 0.0
        %272 = vmatpush1.msra.mxu0 0.0
        %273 = vmatprep.subr.mxu0 0.0
        %274 = vmatpush1.msra.mxu0 0.0
        %275 = vmatprep.subr.mxu0 0.0
        %276 = vmatpush1.msra.mxu0 0.0
        %277 = vmatprep.subr.mxu0 0.0
        %278 = vmatpush1.msra.mxu0 0.0
        %279 = vmatprep.subr.mxu0 0.0
        %280 = vmatpush1.msra.mxu0 0.0
        %281 = vmatprep.subr.mxu0 0.0
        %282 = vmatpush1.msra.mxu0 0.0
        %283 = vmatprep.subr.mxu0 0.0
        %284 = vmatpush1.msra.mxu0 0.0
        %285 = vmatprep.subr.mxu0 0.0
        %286 = vmatpush1.msra.mxu0 0.0
        %287 = vmatprep.subr.mxu0 0.0
        %288 = vmatpush1.msra.mxu0 0.0
        %289 = vmatprep.subr.mxu0 0.0
        %290 = vmatpush1.msra.mxu0 0.0
        %291 = vmatprep.subr.mxu0 0.0
        %292 = vmatpush1.msra.mxu0 0.0
        %293 = vmatprep.subr.mxu0 0.0
        %294 = vmatpush1.msra.mxu0 0.0
        %295 = vmatprep.subr.mxu0 0.0
        %296 = vmatpush1.msra.mxu0 0.0
        %297 = vmatprep.subr.mxu0 0.0
        %298 = vmatpush1.msra.mxu0 0.0
        %299 = vmatprep.subr.mxu0 0.0
        %300 = vmatpush1.msra.mxu0 0.0
        %301 = vmatprep.subr.mxu0 0.0
        %302 = vmatpush1.msra.mxu0 0.0
        %303 = vmatprep.subr.mxu0 0.0
        %304 = vmatpush1.msra.mxu0 0.0
        %305 = vmatprep.subr.mxu0 0.0
        %306 = vmatpush1.msra.mxu0 0.0
        %307 = vmatprep.subr.mxu0 0.0
        %308 = vmatpush1.msra.mxu0 0.0
        %309 = vmatprep.mubr.f32.mxu0 0.0
        %310 = vmatmul.mubr.f32.gmra.mrb[0].mxu0 %v243
        %v311 = vpop.f32.mrb[0].mxu0
        %v312 = vadd.f32 %v240, %v311
        %v313 = vpop.f32.mrb[0].mxu0
        %314 = vdwg.mxu0
        %315 = vst [vmem:[%s211] sm:$0xff] %v312
        %s316 = sand.u32 %s115, 1
        %s317 = scalar_lea.sflag [#allocation4], %s316
        %s318 = sand.u32 %s115, 1
        %s319 = smul.addr %s318, 8
        %s320 = scalar_lea.vmem [#allocation5], %s319
        // Predicated region
        $region37: #{tpu_custom_call.1} parent=31 // pred_check
          %p321 = pneg %p125
        $region38: #{tpu_custom_call.1} parent=31 // pred_check_branch
          %323 = sbr.rel (%p321) target = $region40
        $region39: #{tpu_custom_call.1} parent=31 // pred_region
          %s325 = ssub.s32 128, 128
          %326 = vsyncadd %s317, %s325
          %s327 = sadd.s32 %s23, %s22
          %s328 = smul.addr %s327, 128
          %s329 = scalar_lea.hbm %s3, %s328
          %s331 = sshll.u32 %s320, 4
          %s332 = int_to_ptr.vmem [resolvable:$true] %s331
          %334 = dma.vmem_to_hbm [thread:$0]  %s332, 128, %s329, %s317
        $region40: #{tpu_custom_call.1} parent=31 // pred_fallthru
          _
      $region32: #{tpu_custom_call.1} parent=5 // pred_fallthru
        _
      %p335 = scmp.le.s32.totalorder 2, %s13
      // Predicated region
      $region41: #{tpu_custom_call.1} parent=5 // pred_check
        %p336 = pneg %p335
      $region42: #{tpu_custom_call.1} parent=5 // pred_check_branch
        %338 = sbr.rel (%p336) target = $region44
      $region43: #{tpu_custom_call.1} parent=5 // pred_region
        %s339 = ssub.s32 %s13, 2
        // Predicated region
        $region45: #{tpu_custom_call.1} parent=43 // pred_check
          %p340 = pneg %p131
        $region46: #{tpu_custom_call.1} parent=43 // pred_check_branch
          %342 = sbr.rel (%p340) target = $region48
        $region47: #{tpu_custom_call.1} parent=43 // pred_region
          %s343 = sand.u32 %s116, 1
          %s344 = scalar_lea.sflag [#allocation4], %s343
          %s345 = sand.u32 %s116, 1
          %s346 = smul.addr %s345, 8
          %s347 = scalar_lea.vmem [#allocation5], %s346
          %348 = dma.done %s344, 128
        $region48: #{tpu_custom_call.1} parent=43 // pred_fallthru
          _
      $region44: #{tpu_custom_call.1} parent=5 // pred_fallthru
        _
    $region6: #{tpu_custom_call.1} parent=1 // loop_footer
      %s17 = sadd.s32 1, %s13
    $region7: #{tpu_custom_call.1} parent=1 // loop_footer_branch
      %12 = sbr.rel target = $region3
    $region8: #{tpu_custom_call.1} parent=1 // loop_exit
      _
    %349 = vsyncpa [#allocation3], 1
    %s350 = scalar_lea.sflag [#allocation3], 1
    %351 = vsyncpa %s350, 1
    %352 = vsyncpa [#allocation4], 1
    %s353 = scalar_lea.sflag [#allocation4], 1
    %354 = vsyncpa %s353, 1

</llo_original>
